<compile_context>
chip_gen: v6e
topology: v6e:2x2x1
jax: 0.10.0
libtpu: 0.0.40
codegen_flags: <defaults>
</compile_context>

<pallas_src>
import jax
import jax.numpy as jnp
from jax.experimental import pallas as pl
from jax.experimental.pallas import tpu as pltpu


class EmptyBasisException(Exception):
    def __init__(self):
        super().__init__(
            "The KernelBasis you tried to instantiate is empty (dim = 0). "
            "You should catch this exception."
        )


def _gaussian_radial_kernel(r_ref, radii_ref, scale_ref, out_ref):
    """One grid step over a lane-dense tile of N points.

    r_ref     : (1, TILE_N)    float32   -- radial norm of each point
    radii_ref : (dim, 1)       float32   -- ring radius of each basis element
    scale_ref : (dim, 1)       float32   -- precomputed -0.5 / sigma^2
    out_ref   : (dim, TILE_N)  out dtype -- sampled basis for this tile
    """
    d = r_ref[...] - radii_ref[...]                       # (dim, TILE_N) broadcast
    out_ref[...] = jnp.exp(d * d * scale_ref[...]).astype(out_ref.dtype)


class GaussianRadialKernelBasis:
    """JAX/Pallas analogue of a concrete KernelBasis (c_out = c_in = 1)."""

    # Combined (r input + output) tile budget per buffer.  With default
    # double-buffering the steady-state working set is ~2x this, well under
    # every generation's scoped-VMEM default (16 MiB v5e, 32 MiB v6e/v7x),
    # so no vmem_limit_bytes override is needed.
    _TILE_BYTES = 2 * 1024 * 1024
    # Below this many output bytes a fused XLA expression beats the fixed
    # pallas_call launch cost; skip Pallas unless forced.
    _JNP_FASTPATH_BYTES = 1 << 20

    def __init__(self, radii, sigmas, out_dtype=jnp.float32):
        radii = jnp.asarray(radii, jnp.float32)
        sigmas = jnp.asarray(sigmas, jnp.float32)
        dim = int(radii.shape[0])
        if dim == 0:
            raise EmptyBasisException()
        assert sigmas.shape[0] == dim, (radii.shape, sigmas.shape)
        if bool(jnp.any(sigmas <= 0)):
            raise ValueError(
                "all sigmas must be strictly positive "
                "(sigma == 0 would produce NaN where r == radius)")

        self.dim = dim
        self.shape = (1, 1)                      # (c_out, c_in)
        self.out_dtype = jnp.dtype(out_dtype)    # bf16 halves store traffic if allowed

        self._radii = radii.reshape(dim, 1)
        # Precompute -0.5 / sigma^2 so the kernel does sub + mul + mul + exp only.
        self._scale = (-0.5 / (sigmas * sigmas)).reshape(dim, 1)
        self._sigmas = sigmas

    def __len__(self):
        return self.dim

    def __getitem__(self, idx):
        return {"radius": float(self._radii[idx, 0]),
                "sigma": float(self._sigmas[idx]),
                "idx": idx}

    def _select_tile_n(self, n):
        """Lane-dense tile width: VMEM-budgeted, >= 2 grid steps when possible."""
        lane = 128
        n_blocks = -(-n // lane)
        bytes_per_block = (self.dim * self.out_dtype.itemsize + 4) * lane
        budget_blocks = max(1, self._TILE_BYTES // bytes_per_block)
        # Keep >= 2 grid steps when N allows it so v7x's two TensorCores both
        # get work on the "parallel" axis.
        steps_cap = max(1, -(-n_blocks // 2))
        return max(1, min(n_blocks, budget_blocks, steps_cap)) * lane

    def sample(self, points, out=None, force_pallas=False):
        """points: (N, D) float -> (dim, 1, 1, N) out_dtype."""
        # TODO(synk): the `out=` pre-allocated buffer of the PyTorch API has no
        # clean equivalent in JAX's functional model; the result is returned.
        N, D = points.shape
        pts = points.astype(jnp.float32)

        # Radial norm in the wrapper: one small fused XLA op producing (1, N)
        # f32; avoids a transpose round-trip and an in-kernel reduction over a
        # lane-sparse (N, D) layout.  No explicit padding: Pallas masks the
        # partial final lane block of both the input and the output.
        r = jnp.sqrt(jnp.sum(pts * pts, axis=-1)).reshape(1, N)

        out_bytes = self.dim * N * self.out_dtype.itemsize
        if not force_pallas and out_bytes < self._JNP_FASTPATH_BYTES:
            # Small-problem fast path: XLA fuses this into one kernel and beats
            # the fixed pallas_call launch cost at these sizes.
            d = r - self._radii
            res = jnp.exp(d * d * self._scale).astype(self.out_dtype)
            return res[:, None, None, :]

        dim = self.dim
        tile_n = self._select_tile_n(N)
        grid = (-(-N // tile_n),)

        out_full = pl.pallas_call(
            _gaussian_radial_kernel,
            out_shape=jax.ShapeDtypeStruct((dim, N), self.out_dtype),
            grid_spec=pltpu.PrefetchScalarGridSpec(
                num_scalar_prefetch=0,
                grid=grid,
                in_specs=[
                    # r: lane-dense (1, tile_n) slab per step.
                    pl.BlockSpec((1, tile_n), lambda i: (0, i)),
                    # Per-basis constants: constant block index -> fetched once.
                    pl.BlockSpec((dim, 1), lambda i: (0, 0)),
                    pl.BlockSpec((dim, 1), lambda i: (0, 0)),
                ],
                out_specs=pl.BlockSpec((dim, tile_n), lambda i: (0, i)),
            ),
            compiler_params=pltpu.CompilerParams(
                dimension_semantics=("parallel",)
            ),
        )(r, self._radii, self._scale)

        # (dim, N) -> (dim, c_out=1, c_in=1, N): adding unit axes is free.
        return out_full[:, None, None, :]

    # forward is an alias for sample, matching the PyTorch module.
    def __call__(self, points, out=None, force_pallas=False):
        return self.sample(points, out=out, force_pallas=force_pallas)


if __name__ == "__main__":
    key = jax.random.PRNGKey(0)

    # Small, deterministic setup: dim = 8 basis elements, 2-D base space,
    # N = 256 sample points.
    DIM, D, N = 8, 2, 256
    radii = jnp.linspace(0.0, 3.0, DIM)
    sigmas = jnp.full((DIM,), 0.6, jnp.float32)
    points = jax.random.normal(key, (N, D), dtype=jnp.float32)

    basis = GaussianRadialKernelBasis(radii, sigmas)
    out = jax.block_until_ready(basis.sample(points, force_pallas=True))

    # Pure-JAX reference for correctness.
    r_ref = jnp.sqrt(jnp.sum(points * points, axis=-1))           # (N,)
    d_ref = r_ref[None, :] - radii[:, None]                        # (DIM, N)
    ref = jnp.exp(-0.5 * d_ref * d_ref / (sigmas[:, None] ** 2))   # (DIM, N)
    ref = ref[:, None, None, :]
    assert out.shape == (DIM, 1, 1, N), out.shape
    assert jnp.allclose(out, ref, atol=1e-5, rtol=1e-5)

    # Auto path (small size -> jnp fast path) must agree with the Pallas path.
    out_auto = jax.block_until_ready(basis(points))
    assert jnp.allclose(out_auto, out, atol=1e-6, rtol=1e-6)

    # Ragged N (not a multiple of 128) and dim not a multiple of 8: exercises
    # the partial-block / masked-store path and the multi-step grid.
    N2, DIM2 = 1000, 5
    radii2 = jnp.linspace(0.0, 2.0, DIM2)
    sigmas2 = jnp.full((DIM2,), 0.4, jnp.float32)
    points2 = jax.random.normal(jax.random.PRNGKey(1), (N2, D), dtype=jnp.float32)
    basis2 = GaussianRadialKernelBasis(radii2, sigmas2)
    out2 = jax.block_until_ready(basis2.sample(points2, force_pallas=True))
    r2 = jnp.sqrt(jnp.sum(points2 * points2, axis=-1))
    d2 = r2[None, :] - radii2[:, None]
    ref2 = jnp.exp(-0.5 * d2 * d2 / (sigmas2[:, None] ** 2))[:, None, None, :]
    assert out2.shape == (DIM2, 1, 1, N2), out2.shape
    assert jnp.allclose(out2, ref2, atol=1e-5, rtol=1e-5)

    print("KERNEL_OK")
</pallas_src>

<mosaic_0001>
module attributes {stable_mosaic.version = 11 : i64} {
  func.func @_gaussian_radial_kernel(%arg0: i32, %arg1: memref<1x128xf32, #tpu.memory_space<vmem>>, %arg2: memref<8x1xf32, #tpu.memory_space<vmem>>, %arg3: memref<8x1xf32, #tpu.memory_space<vmem>>, %arg4: memref<8x128xf32, #tpu.memory_space<vmem>>) attributes {dimension_semantics = [#tpu.dimension_semantics<parallel>], iteration_bounds = array<i64: 2>, scalar_prefetch = 0 : i64, scratch_operands = 0 : i64, tpu.core_type = #tpu.core_type<tc>, window_params = [{transform_indices = @transform_0, window_bounds = array<i64: 1, 128>}, {pipeline_mode = #tpu.pipeline_mode<synchronous>, transform_indices = @transform_1, window_bounds = array<i64: 8, 1>}, {pipeline_mode = #tpu.pipeline_mode<synchronous>, transform_indices = @transform_2, window_bounds = array<i64: 8, 1>}, {transform_indices = @transform_3, window_bounds = array<i64: 8, 128>}]} {
    %c0 = arith.constant 0 : index
    %c0_0 = arith.constant 0 : index
    %0 = vector.load %arg1[%c0, %c0_0] : memref<1x128xf32, #tpu.memory_space<vmem>>, vector<1x128xf32>
    %c0_1 = arith.constant 0 : index
    %c0_2 = arith.constant 0 : index
    %1 = vector.load %arg2[%c0_1, %c0_2] : memref<8x1xf32, #tpu.memory_space<vmem>>, vector<8x1xf32>
    %2 = vector.broadcast %0 : vector<1x128xf32> to vector<8x128xf32>
    %3 = vector.broadcast %1 : vector<8x1xf32> to vector<8x128xf32>
    %4 = arith.subf %2, %3 : vector<8x128xf32>
    %5 = arith.mulf %4, %4 : vector<8x128xf32>
    %c0_3 = arith.constant 0 : index
    %c0_4 = arith.constant 0 : index
    %6 = vector.load %arg3[%c0_3, %c0_4] : memref<8x1xf32, #tpu.memory_space<vmem>>, vector<8x1xf32>
    %7 = vector.broadcast %6 : vector<8x1xf32> to vector<8x128xf32>
    %8 = arith.mulf %5, %7 : vector<8x128xf32>
    %9 = math.exp %8 : vector<8x128xf32>
    %c0_5 = arith.constant 0 : index
    %c0_6 = arith.constant 0 : index
    %10 = vector.load %arg4[%c0_5, %c0_6] : memref<8x128xf32, #tpu.memory_space<vmem>>, vector<8x128xf32>
    tpu.vector_store %arg4[%c0_5, %c0_6], %9 {strides = array<i32>} : memref<8x128xf32, #tpu.memory_space<vmem>>, vector<8x128xf32>,
    return
  }
  func.func @transform_0(%arg0: i32) -> (i32, i32) {
    %c0_i32 = arith.constant 0 : i32
    %c0_i32_0 = arith.constant 0 : i32
    return %c0_i32, %arg0 : i32, i32
  }
  func.func @transform_1(%arg0: i32) -> (i32, i32) {
    %c0_i32 = arith.constant 0 : i32
    %c0_i32_0 = arith.constant 0 : i32
    %c0_i32_1 = arith.constant 0 : i32
    return %c0_i32, %c0_i32_0 : i32, i32
  }
  func.func @transform_2(%arg0: i32) -> (i32, i32) {
    %c0_i32 = arith.constant 0 : i32
    %c0_i32_0 = arith.constant 0 : i32
    %c0_i32_1 = arith.constant 0 : i32
    return %c0_i32, %c0_i32_0 : i32, i32
  }
  func.func @transform_3(%arg0: i32) -> (i32, i32) {
    %c0_i32 = arith.constant 0 : i32
    %c0_i32_0 = arith.constant 0 : i32
    return %c0_i32, %arg0 : i32, i32
  }
}

</mosaic_0001>

<llo_original>
// kernel: tpu_custom_call.1
$region0: #{tpu_custom_call.1}
  #allocation0 [shape = 'u32[]', space=smem, size = 0x4, offset = 0x4, fixed_abs, tag = 'smem constant byte address 0x4 - core index']
  #allocation1 [shape = 'u32[144,128]{1,0:T(1,128)}', space=vmem, size = 0x12000, scoped, tag = 'internal scratch']
  %s0 = inlined_call_operand.vmem [shape: f32[1,256], index: 0, kind: input, shape index: {}]
  %s1 = inlined_call_operand.vmem [shape: f32[8,1], index: 1, kind: input, shape index: {}]
  %s2 = inlined_call_operand.vmem [shape: f32[8,1], index: 2, kind: input, shape index: {}]
  %s3 = inlined_call_operand.hbm [shape: f32[8,256], index: 3, kind: output, shape index: {}]
  %s4 = sld [smem:[#allocation0]]
  $region45: #{tpu_custom_call.1} parent=0
    _
  %s6 = ssub.s32 1, %s4
  %s7 = scalar_select 0, %s6, %s4
  $region1: #{tpu_custom_call.1} parent=0
    #allocation2 [shape = 'u8[8192]{0}', space=vmem, size = 0x2000, scoped, tag = 'output window, operand 0']
    #allocation3 [shape = 's32[2]{0}', space=sflag, size = 0x8, scoped, tag = 'scoped memory for tpu_custom_call.1']
    %8 = vsyncpa [#allocation3], 0
    %s9 = scalar_lea.sflag [#allocation3], 1
    %10 = vsyncpa %s9, 0
    loop: start=0, step=1, limit=4
    $region2: #{tpu_custom_call.1} parent=1 // loop_pre_header
      _
    $region3: #{tpu_custom_call.1} parent=1 // loop_header
      %s12 = sphi 0, %s16
      %p13 = scmp.ge.s32.totalorder %s12, 4
      %s22 = sphi 0, %s24
      %s25 = sphi 0, %s22
      %s26 = sphi 0, %s25
      %s42 = sphi 0, %s26
      %s46 = sphi 0, %s46
      %s48 = sphi 0, %s46
      %s49 = sphi 0, %s48
      %s63 = sphi 0, %s49
      %s67 = sphi 0, %s67
      %s69 = sphi 0, %s67
      %s70 = sphi 0, %s69
      %s84 = sphi 0, %s70
      %s90 = sphi 0, %s92
      %s93 = sphi 0, %s90
      %s94 = sphi 0, %s93
      %s110 = sphi 0, %s94
    $region4: #{tpu_custom_call.1} parent=1 // loop_header_branch
      %15 = sbr.rel (%p13) target = $region8
    $region5: #{tpu_custom_call.1} parent=1 // loop_body
      %s17 = ssub.s32 %s12, 1
      %s18 = ssub.s32 %s12, 2
      %s19 = sadd.s32 %s12, 1
      %s20 = ssub.s32 %s12, %s19
      %p21 = scmp.eq.s32.totalorder %s20, 0
      %s23 = sadd.s32 %s22, 1
      %s24 = scalar_select %p21, %s22, %s23
      %p27 = pneg %p21
      %p28 = scmp.eq.s32.totalorder %s12, 1
      %p29 = por %p27, %p28
      %p30 = scmp.ne.s32.totalorder %s22, %s25
      %p31 = scmp.eq.s32.totalorder %s12, 0
      %p32 = por %p30, %p31
      %p33 = scmp.ne.s32.totalorder %s22, %s25
      %p34 = scmp.eq.s32.totalorder %s17, 1
      %p35 = por %p33, %p34
      %p36 = scmp.ne.s32.totalorder %s25, %s26
      %p37 = scmp.eq.s32.totalorder %s17, 0
      %p38 = por %p36, %p37
      %p39 = scmp.ne.s32.totalorder %s25, %s26
      %p40 = scmp.eq.s32.totalorder %s18, 1
      %p41 = por %p39, %p40
      %p43 = scmp.ne.s32.totalorder %s26, %s42
      %p44 = scmp.eq.s32.totalorder %s18, 0
      %p45 = por %p43, %p44
      %s47 = sadd.s32 %s46, 1
      %p50 = scmp.eq.s32.totalorder %s12, 1
      %p51 = scmp.ne.s32.totalorder %s46, %s48
      %p52 = scmp.eq.s32.totalorder %s12, 0
      %p53 = por %p51, %p52
      %p54 = scmp.ne.s32.totalorder %s46, %s48
      %p55 = scmp.eq.s32.totalorder %s17, 1
      %p56 = por %p54, %p55
      %p57 = scmp.ne.s32.totalorder %s48, %s49
      %p58 = scmp.eq.s32.totalorder %s17, 0
      %p59 = por %p57, %p58
      %p60 = scmp.ne.s32.totalorder %s48, %s49
      %p61 = scmp.eq.s32.totalorder %s18, 1
      %p62 = por %p60, %p61
      %p64 = scmp.ne.s32.totalorder %s49, %s63
      %p65 = scmp.eq.s32.totalorder %s18, 0
      %p66 = por %p64, %p65
      %s68 = sadd.s32 %s67, 1
      %p71 = scmp.eq.s32.totalorder %s12, 1
      %p72 = scmp.ne.s32.totalorder %s67, %s69
      %p73 = scmp.eq.s32.totalorder %s12, 0
      %p74 = por %p72, %p73
      %p75 = scmp.ne.s32.totalorder %s67, %s69
      %p76 = scmp.eq.s32.totalorder %s17, 1
      %p77 = por %p75, %p76
      %p78 = scmp.ne.s32.totalorder %s69, %s70
      %p79 = scmp.eq.s32.totalorder %s17, 0
      %p80 = por %p78, %p79
      %p81 = scmp.ne.s32.totalorder %s69, %s70
      %p82 = scmp.eq.s32.totalorder %s18, 1
      %p83 = por %p81, %p82
      %p85 = scmp.ne.s32.totalorder %s70, %s84
      %p86 = scmp.eq.s32.totalorder %s18, 0
      %p87 = por %p85, %p86
      %s88 = ssub.s32 %s12, %s19
      %p89 = scmp.eq.s32.totalorder %s88, 0
      %s91 = sadd.s32 %s90, 1
      %s92 = scalar_select %p89, %s90, %s91
      %p95 = pneg %p89
      %p96 = scmp.eq.s32.totalorder %s12, 1
      %p97 = por %p95, %p96
      %p98 = scmp.ne.s32.totalorder %s90, %s93
      %p99 = scmp.eq.s32.totalorder %s12, 0
      %p100 = por %p98, %p99
      %p101 = scmp.ne.s32.totalorder %s90, %s93
      %p102 = scmp.eq.s32.totalorder %s17, 1
      %p103 = por %p101, %p102
      %p104 = scmp.ne.s32.totalorder %s93, %s94
      %p105 = scmp.eq.s32.totalorder %s17, 0
      %p106 = por %p104, %p105
      %p107 = scmp.ne.s32.totalorder %s93, %s94
      %p108 = scmp.eq.s32.totalorder %s18, 1
      %p109 = por %p107, %p108
      %p111 = scmp.ne.s32.totalorder %s94, %s110
      %p112 = scmp.eq.s32.totalorder %s18, 0
      %p113 = por %p111, %p112
      %p114 = scmp.le.s32.totalorder 1, %s12
      %p115 = scmp.lt.s32.totalorder %s12, 3
      %p116 = pnand %p114, %p115
      %p117 = pneg %p116
      // Predicated region
      $region9: #{tpu_custom_call.1} parent=5 // pred_check
        _
      $region10: #{tpu_custom_call.1} parent=5 // pred_check_branch
        %119 = sbr.rel (%p116) target = $region12
      $region11: #{tpu_custom_call.1} parent=5 // pred_region
        %s120 = ssub.s32 %s12, 1
        // Predicated region
        $region13: #{tpu_custom_call.1} parent=11 // pred_check
          %p121 = pneg %p59
        $region14: #{tpu_custom_call.1} parent=11 // pred_check_branch
          %123 = sbr.rel (%p121) target = $region16
        $region15: #{tpu_custom_call.1} parent=11 // pred_region
          _
        $region16: #{tpu_custom_call.1} parent=11 // pred_fallthru
          _
        // Predicated region
        $region17: #{tpu_custom_call.1} parent=11 // pred_check
          %p124 = pneg %p80
        $region18: #{tpu_custom_call.1} parent=11 // pred_check_branch
          %126 = sbr.rel (%p124) target = $region20
        $region19: #{tpu_custom_call.1} parent=11 // pred_region
          _
        $region20: #{tpu_custom_call.1} parent=11 // pred_fallthru
          _
      $region12: #{tpu_custom_call.1} parent=5 // pred_fallthru
        _
      %p127 = scmp.lt.s32.totalorder %s12, 2
      // Predicated region
      $region21: #{tpu_custom_call.1} parent=5 // pred_check
        %p128 = pneg %p127
      $region22: #{tpu_custom_call.1} parent=5 // pred_check_branch
        %130 = sbr.rel (%p128) target = $region24
      $region23: #{tpu_custom_call.1} parent=5 // pred_region
        // Predicated region
        $region25: #{tpu_custom_call.1} parent=23 // pred_check
          %p131 = pneg %p32
        $region26: #{tpu_custom_call.1} parent=23 // pred_check_branch
          %133 = sbr.rel (%p131) target = $region28
        $region27: #{tpu_custom_call.1} parent=23 // pred_region
          %p134 = scmp.lt.s32.totalorder %s12, 1
          %s135 = scalar_select %p134, %s12, 1
          %s136 = scalar_lea.vmem %s0, %s135
        $region28: #{tpu_custom_call.1} parent=23 // pred_fallthru
          _
      $region24: #{tpu_custom_call.1} parent=5 // pred_fallthru
        _
      %p137 = scmp.le.s32.totalorder 1, %s12
      %p138 = scmp.lt.s32.totalorder %s12, 3
      %p139 = pnand %p137, %p138
      %p140 = pneg %p139
      // Predicated region
      $region29: #{tpu_custom_call.1} parent=5 // pred_check
        _
      $region30: #{tpu_custom_call.1} parent=5 // pred_check_branch
        %142 = sbr.rel (%p139) target = $region32
      $region31: #{tpu_custom_call.1} parent=5 // pred_region
        %s143 = ssub.s32 %s12, 1
        %p144 = scmp.lt.s32.totalorder %s17, 1
        %s145 = scalar_select %p144, %s17, 1
        %s146 = scalar_lea.vmem %s0, %s145
        %p147 = pneg %p38
        %p148 = pneg %p35
        %p149 = pneg %p59
        %p150 = pneg %p56
        %p151 = pneg %p80
        %p152 = pneg %p77
        %p153 = pneg %p106
        %p154 = pneg %p103
        %s155 = sand.u32 %s93, 1
        %s156 = scalar_lea.sflag [#allocation3], %s155
        %s157 = sand.u32 %s93, 1
        %s158 = smul.addr %s157, 8
        %s159 = scalar_lea.vmem [#allocation2], %s158
        %p160 = scmp.lt.s32.totalorder %s17, 1
        %s161 = scalar_select %p160, %s17, 1
        %s162 = scalar_lea.vmem %s0, %s161
        %v163 = vld [vmem:[%s162] sm:$0x1]
        %v164 = vld [vmem:[%s1] sm:$0xff]
        %v166 = vlaneseq
        %v167 = vshrl.u32 %v166, 7
        %v168 = vsub.s32 0, %v167
        %v169 = vrot.slane %v163, %v168
        %172 = vset.pattern.permute.xlu0 0
        %173 = vperm.xlu0 %172, %v164
        %v174 = vpop.permute.xlu0 %173
        %v176 = vsub.f32 %v169, %v174
        %v177 = vmul.f32 %v176, %v176
        %v178 = vld [vmem:[%s2] sm:$0xff]
        %180 = vset.pattern.permute.xlu0 0
        %181 = vperm.xlu0 %180, %v178
        %v182 = vpop.permute.xlu0 %181
        %v184 = vmul.f32 %v177, %v182
        %v185 = vmul.f32 %v184, 1.442695
        %v186 = vpow.pop %v185
        %187 = vst [vmem:[%s159] sm:$0xff] %v186
        %s188 = sand.u32 %s93, 1
        %s189 = scalar_lea.sflag [#allocation3], %s188
        %s190 = sand.u32 %s93, 1
        %s191 = smul.addr %s190, 8
        %s192 = scalar_lea.vmem [#allocation2], %s191
        // Predicated region
        $region33: #{tpu_custom_call.1} parent=31 // pred_check
          %p193 = pneg %p103
        $region34: #{tpu_custom_call.1} parent=31 // pred_check_branch
          %195 = sbr.rel (%p193) target = $region36
        $region35: #{tpu_custom_call.1} parent=31 // pred_region
          %s197 = ssub.s32 128, 128
          %198 = vsyncadd %s189, %s197
          %s199 = smul.addr %s17, 128
          %s200 = scalar_lea.hbm %s3, %s199
          %s202 = sshll.u32 %s192, 4
          %s203 = int_to_ptr.vmem [resolvable:$true] %s202
          %205 = dma.vmem_to_hbm [thread:$0]  %s203, 128, %s200, %s189
        $region36: #{tpu_custom_call.1} parent=31 // pred_fallthru
          _
      $region32: #{tpu_custom_call.1} parent=5 // pred_fallthru
        _
      %p206 = scmp.le.s32.totalorder 2, %s12
      // Predicated region
      $region37: #{tpu_custom_call.1} parent=5 // pred_check
        %p207 = pneg %p206
      $region38: #{tpu_custom_call.1} parent=5 // pred_check_branch
        %209 = sbr.rel (%p207) target = $region40
      $region39: #{tpu_custom_call.1} parent=5 // pred_region
        %s210 = ssub.s32 %s12, 2
        // Predicated region
        $region41: #{tpu_custom_call.1} parent=39 // pred_check
          %p211 = pneg %p109
        $region42: #{tpu_custom_call.1} parent=39 // pred_check_branch
          %213 = sbr.rel (%p211) target = $region44
        $region43: #{tpu_custom_call.1} parent=39 // pred_region
          %s214 = sand.u32 %s94, 1
          %s215 = scalar_lea.sflag [#allocation3], %s214
          %s216 = sand.u32 %s94, 1
          %s217 = smul.addr %s216, 8
          %s218 = scalar_lea.vmem [#allocation2], %s217
          %219 = dma.done %s215, 128
        $region44: #{tpu_custom_call.1} parent=39 // pred_fallthru
          _
      $region40: #{tpu_custom_call.1} parent=5 // pred_fallthru
        _
    $region6: #{tpu_custom_call.1} parent=1 // loop_footer
      %s16 = sadd.s32 1, %s12
    $region7: #{tpu_custom_call.1} parent=1 // loop_footer_branch
      %11 = sbr.rel target = $region3
    $region8: #{tpu_custom_call.1} parent=1 // loop_exit
      _
    %220 = vsyncpa [#allocation3], 1
    %s221 = scalar_lea.sflag [#allocation3], 1
    %222 = vsyncpa %s221, 1

</llo_original>
